<compile_context>
chip_gen: v5e
topology: v5e:2x2
jax: 0.10.0
libtpu: 0.0.40
codegen_flags: <defaults>
</compile_context>

<pallas_src>
import functools

import jax
import jax.numpy as jnp
from jax.experimental import pallas as pl
from jax.experimental.pallas import tpu as pltpu

_LANE = 128
_SUBLANE = 8


def _round_up(x, m):
    return (x + m - 1) // m * m


# ---------------------------------------------------------------------------
# Parameter preparation (done ONCE, outside the per-step path).
# ---------------------------------------------------------------------------
def init_taylor_kan_params(key, layers_hidden, order):
    """Matches TaylorLayer.__init__: coeffs ~ N(0,1)*0.01 (out, in, order); bias zeros (1, out)."""
    params = []
    for in_f, out_f in zip(layers_hidden, layers_hidden[1:]):
        key, sub = jax.random.split(key)
        coeffs = jax.random.normal(sub, (out_f, in_f, order), dtype=jnp.float32) * 0.01
        bias = jnp.zeros((1, out_f), dtype=jnp.float32)
        params.append((coeffs, bias))
    return params


def prepare_fused_params(params, order, input_dim):
    """Pre-lay-out weights for the fused kernel (hoisted out of the forward path).

    Per layer produces:
      w     : ((order-1) * in_pad, dout_pad) bf16, where row block (p-1)*in_pad..+din
              holds coeffs[:, :, p].T (padded input columns get zero rows, so
              padded activations contribute exactly 0).
      b_eff : (1, dout_pad) f32, bias + sum_j coeffs[:, j, 0]  (the folded x^0 term;
              x**0 == 1 for every x, including 0, matching torch semantics).
    """
    assert order >= 2, "order must be >= 2 (order == 1 reduces to a constant layer)"
    prepared = []
    in_dim = input_dim   # true feature count entering this layer
    in_pad = input_dim   # padded width of the activation tensor entering this layer
    for coeffs, bias in params:
        dout, din, ordr = coeffs.shape
        assert din == in_dim and ordr == order
        dout_pad = _round_up(dout, _LANE)

        b_eff = bias.reshape(1, dout).astype(jnp.float32) \
            + coeffs[:, :, 0].astype(jnp.float32).sum(axis=1)[None, :]
        b_eff = jnp.pad(b_eff, ((0, 0), (0, dout_pad - dout)))

        k = (order - 1) * in_pad
        w = jnp.zeros((k, dout_pad), dtype=jnp.float32)
        for p in range(1, order):
            blk = jnp.transpose(coeffs[:, :, p].astype(jnp.float32), (1, 0))  # (din, dout)
            row0 = (p - 1) * in_pad
            w = w.at[row0:row0 + din, :dout].set(blk)

        prepared.append((w.astype(jnp.bfloat16), b_eff))
        in_dim = dout
        in_pad = dout_pad
    return prepared


# ---------------------------------------------------------------------------
# Fused kernel: all TaylorLayers + bias + ReLU in one body, tiled over rows.
# ---------------------------------------------------------------------------
def _fused_taylor_kernel(x_ref, *refs, order, num_layers):
    # refs = (w0, b0, w1, b1, ..., o_ref)
    o_ref = refs[-1]
    wb = refs[:-1]

    h = x_ref[...].astype(jnp.float32)            # (TM, in_pad) activations, f32
    for layer in range(num_layers):               # static unroll over layers
        w_ref = wb[2 * layer]
        b_ref = wb[2 * layer + 1]
        in_pad = w_ref.shape[0] // (order - 1)    # static: padded input width

        # sum_p  (h^p) @ W_p   -- powers built in f32, matmul operands bf16,
        # f32 accumulation on the MXU.  (order==2 => a single matmul per layer.)
        acc = None
        xp = h
        for p in range(1, order):
            row0 = (p - 1) * in_pad
            term = jnp.dot(xp.astype(jnp.bfloat16),
                           w_ref[row0:row0 + in_pad, :],   # static, sublane-aligned view
                           preferred_element_type=jnp.float32)
            acc = term if acc is None else acc + term
            if p < order - 1:
                xp = xp * h

        acc = acc + b_ref[...]                    # effective bias (x^0 folded in)
        h = jnp.maximum(acc, 0.0)                 # TaylorKAN100 appends ReLU per layer

    o_ref[...] = h.astype(o_ref.dtype)            # lane-dense (128-padded) store


def taylor_kan100_forward(x, prepared_params, order, out_dim, tile_rows=512):
    """x: (..., input_dim). Returns (..., out_dim), matching the PyTorch module."""
    lead_shape = x.shape[:-1]
    x2d = x.reshape(-1, x.shape[-1]).astype(jnp.float32)
    n, din = x2d.shape
    num_layers = len(prepared_params)
    dout_pad = prepared_params[-1][0].shape[1]

    # Row tile: large enough to pipeline well, rounded for (8,128) sublane rules.
    tm = min(tile_rows, _round_up(n, _SUBLANE))
    n_pad = _round_up(n, tm)
    if n_pad != n:
        x2d = jnp.pad(x2d, ((0, n_pad - n), (0, 0)))  # zero rows, sliced off below

    in_specs = [pl.BlockSpec((tm, din), lambda i: (i, 0))]
    args = [x2d]
    for w, b in prepared_params:
        in_specs.append(pl.BlockSpec(w.shape, lambda i: (0, 0)))  # weights resident
        in_specs.append(pl.BlockSpec(b.shape, lambda i: (0, 0)))
        args.extend([w, b])

    kernel = functools.partial(_fused_taylor_kernel, order=order, num_layers=num_layers)

    out = pl.pallas_call(
        kernel,
        out_shape=jax.ShapeDtypeStruct((n_pad, dout_pad), jnp.float32),
        grid=(n_pad // tm,),
        in_specs=in_specs,
        out_specs=pl.BlockSpec((tm, dout_pad), lambda i: (i, 0)),
        compiler_params=pltpu.CompilerParams(
            dimension_semantics=("parallel",),   # shard row tiles across TCs (v7x)
        ),
    )(*args)

    out = out[:n, :out_dim]                       # drop row + lane padding
    return out.reshape(lead_shape + (out_dim,))


# ---------------------------------------------------------------------------
# Pure-JAX reference mirroring the PyTorch loop (f32 everywhere).
# ---------------------------------------------------------------------------
def _reference_forward(x, params, order):
    lead_shape = x.shape[:-1]
    h = x.reshape(-1, x.shape[-1]).astype(jnp.float32)
    for coeffs, bias in params:
        y = jnp.zeros((h.shape[0], coeffs.shape[0]), dtype=jnp.float32)
        for i in range(order):
            y = y + jnp.einsum("nj,oj->no", h ** i, coeffs[:, :, i])
        y = y + bias
        h = jnp.maximum(y, 0.0)
    return h.reshape(lead_shape + (h.shape[-1],))


if __name__ == "__main__":
    key = jax.random.PRNGKey(0)
    k_x, k_p2, k_p3 = jax.random.split(key, 3)

    layers_hidden = [32, 64, 16]   # two TaylorLayers (32->64, 64->16), ReLU after each
    x = jax.random.normal(k_x, (2, 4, 32), dtype=jnp.float32)

    # Exercise both the module default (order=2, single matmul/layer) and the
    # multi-power accumulation path (order=3).
    for order, k_p in ((2, k_p2), (3, k_p3)):
        params = init_taylor_kan_params(k_p, layers_hidden, order)
        prepared = prepare_fused_params(params, order, layers_hidden[0])

        fwd = jax.jit(functools.partial(
            taylor_kan100_forward,
            prepared_params=prepared, order=order, out_dim=layers_hidden[-1]))
        out = jax.block_until_ready(fwd(x))

        ref = _reference_forward(x, params, order)
        assert out.shape == (2, 4, 16), out.shape
        # bf16 MXU operands (f32 accumulation) => loosened tolerance vs f32 reference.
        err = float(jnp.max(jnp.abs(out - ref)))
        assert jnp.allclose(out, ref, atol=2e-3, rtol=2e-2), \
            f"order={order}: mismatch vs reference, max abs err = {err}"

    print("KERNEL_OK")
</pallas_src>

<mosaic_0001>
module attributes {stable_mosaic.version = 11 : i64} {
  func.func @_fused_taylor_kernel(%arg0: i32, %arg1: memref<8x32xf32, #tpu.memory_space<vmem>>, %arg2: memref<32x128xbf16, #tpu.memory_space<vmem>>, %arg3: memref<1x128xf32, #tpu.memory_space<vmem>>, %arg4: memref<128x128xbf16, #tpu.memory_space<vmem>>, %arg5: memref<1x128xf32, #tpu.memory_space<vmem>>, %arg6: memref<8x128xf32, #tpu.memory_space<vmem>>) attributes {dimension_semantics = [#tpu.dimension_semantics<parallel>], iteration_bounds = array<i64: 1>, scalar_prefetch = 0 : i64, scratch_operands = 0 : i64, tpu.core_type = #tpu.core_type<tc>, window_params = [{transform_indices = @transform_0, window_bounds = array<i64: 8, 32>}, {pipeline_mode = #tpu.pipeline_mode<synchronous>, transform_indices = @transform_1, window_bounds = array<i64: 32, 128>}, {pipeline_mode = #tpu.pipeline_mode<synchronous>, transform_indices = @transform_2, window_bounds = array<i64: 1, 128>}, {pipeline_mode = #tpu.pipeline_mode<synchronous>, transform_indices = @transform_3, window_bounds = array<i64: 128, 128>}, {pipeline_mode = #tpu.pipeline_mode<synchronous>, transform_indices = @transform_4, window_bounds = array<i64: 1, 128>}, {transform_indices = @transform_5, window_bounds = array<i64: 8, 128>}]} {
    %c0 = arith.constant 0 : index
    %c0_0 = arith.constant 0 : index
    %0 = vector.load %arg1[%c0, %c0_0] : memref<8x32xf32, #tpu.memory_space<vmem>>, vector<8x32xf32>
    %1 = arith.truncf %0 : vector<8x32xf32> to vector<8x32xbf16>
    %c0_1 = arith.constant 0 : index
    %c0_2 = arith.constant 0 : index
    %2 = vector.load %arg2[%c0_1, %c0_2] : memref<32x128xbf16, #tpu.memory_space<vmem>>, vector<32x128xbf16>
    %cst = arith.constant dense<0.000000e+00> : vector<8x128xf32>
    %3 = tpu.matmul %1, %2, %cst {dimension_numbers = #tpu.dot_dimension_numbers<[1], [0], [0], [1], [0, 0, 1, 1], [], []>} : vector<8x32xbf16>, vector<32x128xbf16>, vector<8x128xf32> -> vector<8x128xf32>
    %c0_3 = arith.constant 0 : index
    %c0_4 = arith.constant 0 : index
    %4 = vector.load %arg3[%c0_3, %c0_4] : memref<1x128xf32, #tpu.memory_space<vmem>>, vector<1x128xf32>
    %5 = vector.broadcast %4 : vector<1x128xf32> to vector<8x128xf32>
    %6 = arith.addf %3, %5 : vector<8x128xf32>
    %cst_5 = arith.constant 0.000000e+00 : f32
    %7 = vector.broadcast %cst_5 : f32 to vector<8x128xf32>
    %8 = arith.maximumf %6, %7 : vector<8x128xf32>
    %9 = arith.truncf %8 : vector<8x128xf32> to vector<8x128xbf16>
    %c0_6 = arith.constant 0 : index
    %c0_7 = arith.constant 0 : index
    %10 = vector.load %arg4[%c0_6, %c0_7] : memref<128x128xbf16, #tpu.memory_space<vmem>>, vector<128x128xbf16>
    %cst_8 = arith.constant dense<0.000000e+00> : vector<8x128xf32>
    %11 = tpu.matmul %9, %10, %cst_8 {dimension_numbers = #tpu.dot_dimension_numbers<[1], [0], [0], [1], [0, 0, 1, 1], [], []>} : vector<8x128xbf16>, vector<128x128xbf16>, vector<8x128xf32> -> vector<8x128xf32>
    %c0_9 = arith.constant 0 : index
    %c0_10 = arith.constant 0 : index
    %12 = vector.load %arg5[%c0_9, %c0_10] : memref<1x128xf32, #tpu.memory_space<vmem>>, vector<1x128xf32>
    %13 = vector.broadcast %12 : vector<1x128xf32> to vector<8x128xf32>
    %14 = arith.addf %11, %13 : vector<8x128xf32>
    %cst_11 = arith.constant 0.000000e+00 : f32
    %15 = vector.broadcast %cst_11 : f32 to vector<8x128xf32>
    %16 = arith.maximumf %14, %15 : vector<8x128xf32>
    %c0_12 = arith.constant 0 : index
    %c0_13 = arith.constant 0 : index
    %17 = vector.load %arg6[%c0_12, %c0_13] : memref<8x128xf32, #tpu.memory_space<vmem>>, vector<8x128xf32>
    tpu.vector_store %arg6[%c0_12, %c0_13], %16 {strides = array<i32>} : memref<8x128xf32, #tpu.memory_space<vmem>>, vector<8x128xf32>,
    return
  }
  func.func @transform_0(%arg0: i32) -> (i32, i32) {
    %c0_i32 = arith.constant 0 : i32
    %c0_i32_0 = arith.constant 0 : i32
    return %arg0, %c0_i32 : i32, i32
  }
  func.func @transform_1(%arg0: i32) -> (i32, i32) {
    %c0_i32 = arith.constant 0 : i32
    %c0_i32_0 = arith.constant 0 : i32
    %c0_i32_1 = arith.constant 0 : i32
    return %c0_i32, %c0_i32_0 : i32, i32
  }
  func.func @transform_2(%arg0: i32) -> (i32, i32) {
    %c0_i32 = arith.constant 0 : i32
    %c0_i32_0 = arith.constant 0 : i32
    %c0_i32_1 = arith.constant 0 : i32
    return %c0_i32, %c0_i32_0 : i32, i32
  }
  func.func @transform_3(%arg0: i32) -> (i32, i32) {
    %c0_i32 = arith.constant 0 : i32
    %c0_i32_0 = arith.constant 0 : i32
    %c0_i32_1 = arith.constant 0 : i32
    return %c0_i32, %c0_i32_0 : i32, i32
  }
  func.func @transform_4(%arg0: i32) -> (i32, i32) {
    %c0_i32 = arith.constant 0 : i32
    %c0_i32_0 = arith.constant 0 : i32
    %c0_i32_1 = arith.constant 0 : i32
    return %c0_i32, %c0_i32_0 : i32, i32
  }
  func.func @transform_5(%arg0: i32) -> (i32, i32) {
    %c0_i32 = arith.constant 0 : i32
    %c0_i32_0 = arith.constant 0 : i32
    return %arg0, %c0_i32 : i32, i32
  }
}

</mosaic_0001>

<llo_original>
// kernel: taylor_kan100_forward.1
$region0: #{taylor_kan100_forward.1}
  #allocation0 [shape = 'u32[]', space=smem, size = 0x4, offset = 0x4, fixed_abs, tag = 'smem constant byte address 0x4 - core index']
  #allocation1 [shape = 'u32[72,128]{1,0:T(1,128)}', space=vmem, size = 0x9000, scoped, tag = 'internal scratch']
  %s0 = inlined_call_operand.hbm [shape: f32[8,32], index: 0, kind: input, shape index: {}]
  %s1 = inlined_call_operand.hbm [shape: bf16[32,128], index: 1, kind: input, shape index: {}]
  %s2 = inlined_call_operand.vmem [shape: f32[1,128], index: 2, kind: input, shape index: {}]
  %s3 = inlined_call_operand.hbm [shape: bf16[128,128], index: 3, kind: input, shape index: {}]
  %s4 = inlined_call_operand.vmem [shape: f32[1,128], index: 4, kind: input, shape index: {}]
  %s5 = inlined_call_operand.hbm [shape: f32[8,128], index: 5, kind: output, shape index: {}]
  %s6 = sld [smem:[#allocation0]]
  $region42: #{taylor_kan100_forward.1} parent=0
    _
  %s8 = ssub.s32 1, %s6
  %s9 = scalar_select 0, %s8, %s6
  $region1: #{taylor_kan100_forward.1} parent=0
    #allocation2 [shape = 'u8[4096]{0}', space=vmem, size = 0x1000, scoped, tag = 'input window, operand 0, single buffered']
    #allocation3 [shape = 's32[1]{0}', space=sflag, size = 0x4, scoped, tag = 'scoped memory for taylor_kan100_forward.1']
    #allocation4 [shape = 's32[1]{0}', space=sflag, size = 0x4, scoped, tag = 'scoped memory for taylor_kan100_forward.1']
    #allocation5 [shape = 'u8[8192]{0}', space=vmem, size = 0x2000, scoped, tag = 'input window, operand 1, single buffered']
    #allocation6 [shape = 's32[1]{0}', space=sflag, size = 0x4, scoped, tag = 'scoped memory for taylor_kan100_forward.1']
    #allocation7 [shape = 'u8[32768]{0}', space=vmem, size = 0x8000, scoped, tag = 'input window, operand 3, single buffered']
    #allocation8 [shape = 'u8[4096]{0}', space=vmem, size = 0x1000, scoped, tag = 'output window, operand 0, single buffered']
    %10 = vsyncpa [#allocation3], 0
    %11 = vsyncpa [#allocation6], 0
    %12 = vsyncpa [#allocation4], 0
    // Predicated region
    $region2: #{taylor_kan100_forward.1} parent=1 // pred_check
      _
    $region3: #{taylor_kan100_forward.1} parent=1 // pred_check_branch
      %14 = sbr.rel (0) target = $region5
    $region4: #{taylor_kan100_forward.1} parent=1 // pred_region
      %16 = vsyncadd [#allocation3], 0
      %s18 = sshll.u32 %s0, 4
      %s19 = int_to_ptr.hbm [resolvable:$true] %s18
      %s20 = sshll.u32 [#allocation2], 4
      %s21 = int_to_ptr.vmem [resolvable:$true] %s20
      %23 = dma.hbm_to_vmem [thread:$0]  %s19, 128, %s21, [#allocation3]
    $region5: #{taylor_kan100_forward.1} parent=1 // pred_fallthru
      _
    // Predicated region
    $region6: #{taylor_kan100_forward.1} parent=1 // pred_check
      _
    $region7: #{taylor_kan100_forward.1} parent=1 // pred_check_branch
      %25 = sbr.rel (0) target = $region9
    $region8: #{taylor_kan100_forward.1} parent=1 // pred_region
      %27 = vsyncadd [#allocation6], 0
      %s28 = sshll.u32 %s1, 4
      %s29 = int_to_ptr.hbm [resolvable:$true] %s28
      %s30 = sshll.u32 [#allocation5], 4
      %s31 = int_to_ptr.vmem [resolvable:$true] %s30
      %36 = dma.hbm_to_vmem [thread:$0]  %s29, 256, %s31, [#allocation6], 64, 64, 4
    $region9: #{taylor_kan100_forward.1} parent=1 // pred_fallthru
      _
    // Predicated region
    $region10: #{taylor_kan100_forward.1} parent=1 // pred_check
      _
    $region11: #{taylor_kan100_forward.1} parent=1 // pred_check_branch
      %38 = sbr.rel (0) target = $region13
    $region12: #{taylor_kan100_forward.1} parent=1 // pred_region
      _
    $region13: #{taylor_kan100_forward.1} parent=1 // pred_fallthru
      _
    // Predicated region
    $region14: #{taylor_kan100_forward.1} parent=1 // pred_check
      _
    $region15: #{taylor_kan100_forward.1} parent=1 // pred_check_branch
      %40 = sbr.rel (0) target = $region17
    $region16: #{taylor_kan100_forward.1} parent=1 // pred_region
      %42 = vsyncadd [#allocation6], 0
      %s43 = sshll.u32 %s3, 4
      %s44 = int_to_ptr.hbm [resolvable:$true] %s43
      %s45 = sshll.u32 [#allocation7], 4
      %s46 = int_to_ptr.vmem [resolvable:$true] %s45
      %51 = dma.hbm_to_vmem [thread:$0]  %s44, 1024, %s46, [#allocation6], 64, 64, 4
    $region17: #{taylor_kan100_forward.1} parent=1 // pred_fallthru
      _
    // Predicated region
    $region18: #{taylor_kan100_forward.1} parent=1 // pred_check
      _
    $region19: #{taylor_kan100_forward.1} parent=1 // pred_check_branch
      %53 = sbr.rel (0) target = $region21
    $region20: #{taylor_kan100_forward.1} parent=1 // pred_region
      _
    $region21: #{taylor_kan100_forward.1} parent=1 // pred_fallthru
      _
    // Predicated region
    $region22: #{taylor_kan100_forward.1} parent=1 // pred_check
      _
    $region23: #{taylor_kan100_forward.1} parent=1 // pred_check_branch
      %55 = sbr.rel (0) target = $region25
    $region24: #{taylor_kan100_forward.1} parent=1 // pred_region
      %57 = dma.done [#allocation3], 128
    $region25: #{taylor_kan100_forward.1} parent=1 // pred_fallthru
      _
    // Predicated region
    $region26: #{taylor_kan100_forward.1} parent=1 // pred_check
      _
    $region27: #{taylor_kan100_forward.1} parent=1 // pred_check_branch
      %59 = sbr.rel (0) target = $region29
    $region28: #{taylor_kan100_forward.1} parent=1 // pred_region
      %61 = dma.done [#allocation6], 256
    $region29: #{taylor_kan100_forward.1} parent=1 // pred_fallthru
      _
    // Predicated region
    $region30: #{taylor_kan100_forward.1} parent=1 // pred_check
      _
    $region31: #{taylor_kan100_forward.1} parent=1 // pred_check_branch
      %63 = sbr.rel (0) target = $region33
    $region32: #{taylor_kan100_forward.1} parent=1 // pred_region
      %65 = dma.done [#allocation6], 1024
    $region33: #{taylor_kan100_forward.1} parent=1 // pred_fallthru
      _
    %v67 = vld [vmem:[#allocation2] sm:$0xff]
    %v68 = vpack.c.bf16 %v67, %v67
    %v69 = vld [vmem:[#allocation5] sm:$0xf]
    %v70 = vld [vmem:[#allocation5 + $0x4] sm:$0xf]
    %v71 = vld [vmem:[#allocation5 + $0x8] sm:$0xf]
    %v72 = vld [vmem:[#allocation5 + $0xc] sm:$0xf]
    %v73 = vld [vmem:[%s2] sm:$0x1]
    %v75 = vperm.slane %v73, 0
    %v81 = vunpack.c.l.b16 %v69
    %v82 = vunpack.c.l.b16 %v70
    %v83 = vunpack.c.l.b16 %v71
    %v84 = vunpack.c.l.b16 %v72
    %v85 = vpack.c.b16 %v82, %v81
    %v86 = vpack.c.b16 %v84, %v83
    %vm89 = vcmask 261120
    %v91 = vsel %vm89, %v68, 0
    %93 = vmatpush.bf16.msra.mxu0 0
    %94 = vmatpush.bf16.msra.mxu0 0
    %95 = vmatpush.bf16.msra.mxu0 0
    %96 = vmatpush.bf16.msra.mxu0 0
    %97 = vmatpush.bf16.msra.mxu0 0
    %98 = vmatpush.bf16.msra.mxu0 0
    %99 = vmatpush.bf16.msra.mxu0 %v86
    %100 = vmatpush.bf16.msra.mxu0 %v85
    %101 = vmatmul.bf16.gmra.mxu0 %v91
    %v102 = vpop.f32.mrf.mxu0
    %v103 = vadd.f32 %v75, %v102
    %v104 = vpop.f32.mrf.mxu0
    %105 = vdwg.mxu0
    %v106 = vmax.f32 %v103, 0.0
    %v107 = vpack.c.bf16 %v106, %v106
    %v108 = vld [vmem:[#allocation7] sm:$0xf]
    %v109 = vld [vmem:[#allocation7 + $0x4] sm:$0xf]
    %v110 = vld [vmem:[#allocation7 + $0x8] sm:$0xf]
    %v111 = vld [vmem:[#allocation7 + $0xc] sm:$0xf]
    %v112 = vld [vmem:[#allocation7 + $0x10] sm:$0xf]
    %v113 = vld [vmem:[#allocation7 + $0x14] sm:$0xf]
    %v114 = vld [vmem:[#allocation7 + $0x18] sm:$0xf]
    %v115 = vld [vmem:[#allocation7 + $0x1c] sm:$0xf]
    %v116 = vld [vmem:[#allocation7 + $0x20] sm:$0xf]
    %v117 = vld [vmem:[#allocation7 + $0x24] sm:$0xf]
    %v118 = vld [vmem:[#allocation7 + $0x28] sm:$0xf]
    %v119 = vld [vmem:[#allocation7 + $0x2c] sm:$0xf]
    %v120 = vld [vmem:[#allocation7 + $0x30] sm:$0xf]
    %v121 = vld [vmem:[#allocation7 + $0x34] sm:$0xf]
    %v122 = vld [vmem:[#allocation7 + $0x38] sm:$0xf]
    %v123 = vld [vmem:[#allocation7 + $0x3c] sm:$0xf]
    %v124 = vld [vmem:[%s4] sm:$0x1]
    %v126 = vperm.slane %v124, 0
    %v144 = vunpack.c.l.b16 %v108
    %v145 = vunpack.c.l.b16 %v109
    %v146 = vunpack.c.l.b16 %v110
    %v147 = vunpack.c.l.b16 %v111
    %v148 = vunpack.c.l.b16 %v112
    %v149 = vunpack.c.l.b16 %v113
    %v150 = vunpack.c.l.b16 %v114
    %v151 = vunpack.c.l.b16 %v115
    %v152 = vunpack.c.l.b16 %v116
    %v153 = vunpack.c.l.b16 %v117
    %v154 = vunpack.c.l.b16 %v118
    %v155 = vunpack.c.l.b16 %v119
    %v156 = vunpack.c.l.b16 %v120
    %v157 = vunpack.c.l.b16 %v121
    %v158 = vunpack.c.l.b16 %v122
    %v159 = vunpack.c.l.b16 %v123
    %v160 = vpack.c.b16 %v145, %v144
    %v161 = vpack.c.b16 %v147, %v146
    %v162 = vpack.c.b16 %v149, %v148
    %v163 = vpack.c.b16 %v151, %v150
    %v164 = vpack.c.b16 %v153, %v152
    %v165 = vpack.c.b16 %v155, %v154
    %v166 = vpack.c.b16 %v157, %v156
    %v167 = vpack.c.b16 %v159, %v158
    %176 = vmatpush.bf16.msra.mxu0 %v167
    %177 = vmatpush.bf16.msra.mxu0 %v166
    %178 = vmatpush.bf16.msra.mxu0 %v165
    %179 = vmatpush.bf16.msra.mxu0 %v164
    %180 = vmatpush.bf16.msra.mxu0 %v163
    %181 = vmatpush.bf16.msra.mxu0 %v162
    %182 = vmatpush.bf16.msra.mxu0 %v161
    %183 = vmatpush.bf16.msra.mxu0 %v160
    %184 = vmatmul.bf16.gmra.mxu0 %v107
    %v185 = vpop.f32.mrf.mxu0
    %v186 = vadd.f32 %v126, %v185
    %v187 = vpop.f32.mrf.mxu0
    %188 = vdwg.mxu0
    %v189 = vmax.f32 %v186, 0.0
    %190 = vst [vmem:[#allocation8] sm:$0xff] %v189
    // Predicated region
    $region34: #{taylor_kan100_forward.1} parent=1 // pred_check
      _
    $region35: #{taylor_kan100_forward.1} parent=1 // pred_check_branch
      %192 = sbr.rel (0) target = $region37
    $region36: #{taylor_kan100_forward.1} parent=1 // pred_region
      %194 = vsyncadd [#allocation4], 0
      %s196 = sshll.u32 [#allocation8], 4
      %s197 = int_to_ptr.vmem [resolvable:$true] %s196
      %s198 = sshll.u32 %s5, 4
      %s199 = int_to_ptr.hbm [resolvable:$true] %s198
      %201 = dma.vmem_to_hbm [thread:$0]  %s197, 128, %s199, [#allocation4]
    $region37: #{taylor_kan100_forward.1} parent=1 // pred_fallthru
      _
    // Predicated region
    $region38: #{taylor_kan100_forward.1} parent=1 // pred_check
      _
    $region39: #{taylor_kan100_forward.1} parent=1 // pred_check_branch
      %203 = sbr.rel (0) target = $region41
    $region40: #{taylor_kan100_forward.1} parent=1 // pred_region
      %205 = dma.done [#allocation4], 128
    $region41: #{taylor_kan100_forward.1} parent=1 // pred_fallthru
      _
    %206 = vsyncpa [#allocation3], 1
    %207 = vsyncpa [#allocation6], 1
    %208 = vsyncpa [#allocation4], 1

</llo_original>
